<compile_context>
chip_gen: v5e
topology: v5e:2x2
jax: 0.10.0
libtpu: 0.0.40
codegen_flags: <defaults>
</compile_context>

<pallas_src>
import jax
import jax.numpy as jnp
from jax.experimental import pallas as pl
from jax.experimental.pallas import tpu as pltpu


# --------------------------------------------------------------------------
# Production path: torch's .view(N, -1) is a free, metadata-only reshape.
# --------------------------------------------------------------------------
def flatten_layer(x: jax.Array) -> jax.Array:
    """FlattenLayer.forward: (N, ...) -> (N, prod(...)). Zero-cost view."""
    n = x.shape[0]
    k = 1
    for d in x.shape[1:]:
        k *= d
    return jnp.reshape(x, (n, k))


# --------------------------------------------------------------------------
# Pallas path: explicit materializing copy of the flattened tensor.
# --------------------------------------------------------------------------
def _flatten_copy_kernel(x_ref, o_ref):
    # Pure lane-dense tile copy; one (TM, TN) block per grid step.
    o_ref[...] = x_ref[...]


def _largest_divisor_multiple(dim: int, unit: int, cap: int) -> int:
    """Largest b <= cap with b % unit == 0 and dim % b == 0; else full dim.

    Falling back to the full dim is always legal (full-extent exemption from
    the (8,128) block rule) and keeps the last block un-ragged.
    """
    if dim <= cap:
        return dim
    b = (min(cap, dim) // unit) * unit
    while b >= unit:
        if dim % b == 0:
            return b
        b -= unit
    return dim


def flatten_layer_pallas(x: jax.Array) -> jax.Array:
    """Materializing flatten copy through a tiled Pallas kernel."""
    n = x.shape[0]
    k = 1
    for d in x.shape[1:]:
        k *= d

    # Row-major flatten (free view at the XLA level), matching torch .view.
    x2d = jnp.reshape(x, (n, k))

    itemsize = jnp.dtype(x.dtype).itemsize
    sublane = {4: 8, 2: 16, 1: 32}.get(itemsize, 8)   # f32 / bf16 / int8 packing
    LANE = 128

    # Cap each block at ~2 MiB: double-buffered in+out => ~8 MiB of VMEM,
    # which fits comfortably under v5e/v6e/v7x scoped-VMEM budgets while being
    # well past the measured ~85% HBM-roofline knee for mem-bound copies.
    MAX_BLOCK_BYTES = 2 * 1024 * 1024
    max_elems = max(1, MAX_BLOCK_BYTES // itemsize)

    # Lane axis first (lane-dense, unmasked vst is the biggest single lever).
    tn = _largest_divisor_multiple(k, LANE, min(k, 2048, max_elems))
    tm_cap = max(1, max_elems // tn)
    tm = _largest_divisor_multiple(n, sublane, min(n, tm_cap))

    grid = (pl.cdiv(n, tm), pl.cdiv(k, tn))

    # NOTE: on v5e (zero compute to hide DMA behind, single vst slot) a deeper
    # input pipeline, e.g. pipeline_mode=pl.Buffered(3) on the input spec, can
    # help further; kept at default double-buffering here for portability.
    out = pl.pallas_call(
        _flatten_copy_kernel,
        out_shape=jax.ShapeDtypeStruct((n, k), x.dtype),
        grid=grid,
        in_specs=[pl.BlockSpec((tm, tn), lambda i, j: (i, j))],
        out_specs=pl.BlockSpec((tm, tn), lambda i, j: (i, j)),
        compiler_params=pltpu.CompilerParams(
            dimension_semantics=("parallel", "parallel"),
            vmem_limit_bytes=32 * 1024 * 1024,
        ),
    )(x2d)
    return out


if __name__ == "__main__":
    key = jax.random.PRNGKey(0)
    # Small NCHW conv-style input.
    N, C, H, W = 2, 4, 16, 16
    x = jax.random.normal(key, (N, C, H, W), dtype=jnp.float32)

    # Run the Pallas kernel path once.
    y = flatten_layer_pallas(x)
    y = jax.block_until_ready(y)

    # Reference semantics of x.view(N, -1).
    ref = jnp.reshape(x, (N, C * H * W))
    assert y.shape == (N, C * H * W), y.shape
    assert y.dtype == x.dtype, y.dtype
    assert bool(jnp.array_equal(y, ref)), "mismatch vs reference flatten"

    # Zero-cost production path agrees too.
    y0 = flatten_layer(x)
    assert bool(jnp.array_equal(y0, ref)), "mismatch on reshape-only path"

    print("KERNEL_OK")
</pallas_src>

<mosaic_0001>
module attributes {stable_mosaic.version = 11 : i64} {
  func.func @_flatten_copy_kernel(%arg0: i32, %arg1: i32, %arg2: memref<2x1024xf32, #tpu.memory_space<vmem>>, %arg3: memref<2x1024xf32, #tpu.memory_space<vmem>>) attributes {dimension_semantics = [#tpu.dimension_semantics<parallel>, #tpu.dimension_semantics<parallel>], iteration_bounds = array<i64: 1, 1>, scalar_prefetch = 0 : i64, scratch_operands = 0 : i64, tpu.core_type = #tpu.core_type<tc>, window_params = [{transform_indices = @transform_0, window_bounds = array<i64: 2, 1024>}, {transform_indices = @transform_1, window_bounds = array<i64: 2, 1024>}]} {
    %c0 = arith.constant 0 : index
    %c0_0 = arith.constant 0 : index
    %0 = vector.load %arg2[%c0, %c0_0] : memref<2x1024xf32, #tpu.memory_space<vmem>>, vector<2x1024xf32>
    %c0_1 = arith.constant 0 : index
    %c0_2 = arith.constant 0 : index
    %1 = vector.load %arg3[%c0_1, %c0_2] : memref<2x1024xf32, #tpu.memory_space<vmem>>, vector<2x1024xf32>
    tpu.vector_store %arg3[%c0_1, %c0_2], %0 {strides = array<i32>} : memref<2x1024xf32, #tpu.memory_space<vmem>>, vector<2x1024xf32>,
    return
  }
  func.func @transform_0(%arg0: i32, %arg1: i32) -> (i32, i32) {
    %c0_i32 = arith.constant 0 : i32
    return %arg0, %arg1 : i32, i32
  }
  func.func @transform_1(%arg0: i32, %arg1: i32) -> (i32, i32) {
    %c0_i32 = arith.constant 0 : i32
    return %arg0, %arg1 : i32, i32
  }
}

</mosaic_0001>

<llo_original>
// kernel: tpu_custom_call.1
$region0: #{tpu_custom_call.1}
  #allocation0 [shape = 'u32[]', space=smem, size = 0x4, offset = 0x4, fixed_abs, tag = 'smem constant byte address 0x4 - core index']
  #allocation1 [shape = 'u32[72,128]{1,0:T(1,128)}', space=vmem, size = 0x9000, scoped, tag = 'internal scratch']
  %s0 = inlined_call_operand.hbm [shape: f32[2,1024], index: 0, kind: input, shape index: {}]
  %s1 = inlined_call_operand.hbm [shape: f32[2,1024], index: 1, kind: output, shape index: {}]
  %s2 = sld [smem:[#allocation0]]
  $region18: #{tpu_custom_call.1} parent=0
    _
  %s4 = ssub.s32 1, %s2
  %s5 = scalar_select 0, %s4, %s2
  $region1: #{tpu_custom_call.1} parent=0
    #allocation2 [shape = 'u8[8192]{0}', space=vmem, size = 0x2000, scoped, tag = 'input window, operand 0, single buffered']
    #allocation3 [shape = 's32[1]{0}', space=sflag, size = 0x4, scoped, tag = 'scoped memory for tpu_custom_call.1']
    #allocation4 [shape = 's32[1]{0}', space=sflag, size = 0x4, scoped, tag = 'scoped memory for tpu_custom_call.1']
    #allocation5 [shape = 'u8[8192]{0}', space=vmem, size = 0x2000, scoped, tag = 'output window, operand 0, single buffered']
    %6 = vsyncpa [#allocation3], 0
    %7 = vsyncpa [#allocation4], 0
    // Predicated region
    $region2: #{tpu_custom_call.1} parent=1 // pred_check
      _
    $region3: #{tpu_custom_call.1} parent=1 // pred_check_branch
      %9 = sbr.rel (0) target = $region5
    $region4: #{tpu_custom_call.1} parent=1 // pred_region
      %11 = vsyncadd [#allocation3], 0
      %s13 = sshll.u32 %s0, 4
      %s14 = int_to_ptr.hbm [resolvable:$true] %s13
      %s15 = sshll.u32 [#allocation2], 4
      %s16 = int_to_ptr.vmem [resolvable:$true] %s15
      %18 = dma.hbm_to_vmem [thread:$0]  %s14, 256, %s16, [#allocation3]
    $region5: #{tpu_custom_call.1} parent=1 // pred_fallthru
      _
    // Predicated region
    $region6: #{tpu_custom_call.1} parent=1 // pred_check
      _
    $region7: #{tpu_custom_call.1} parent=1 // pred_check_branch
      %20 = sbr.rel (0) target = $region9
    $region8: #{tpu_custom_call.1} parent=1 // pred_region
      %22 = dma.done [#allocation3], 256
    $region9: #{tpu_custom_call.1} parent=1 // pred_fallthru
      _
    %v23 = vld [vmem:[#allocation2] sm:$0xff]
    %v24 = vld [vmem:[#allocation2 + $0x8] sm:$0xff]
    %25 = vst [vmem:[#allocation5] sm:$0xff] %v23
    %26 = vst [vmem:[#allocation5 + $0x8] sm:$0xff] %v24
    // Predicated region
    $region10: #{tpu_custom_call.1} parent=1 // pred_check
      _
    $region11: #{tpu_custom_call.1} parent=1 // pred_check_branch
      %28 = sbr.rel (0) target = $region13
    $region12: #{tpu_custom_call.1} parent=1 // pred_region
      %30 = vsyncadd [#allocation4], 0
      %s32 = sshll.u32 [#allocation5], 4
      %s33 = int_to_ptr.vmem [resolvable:$true] %s32
      %s34 = sshll.u32 %s1, 4
      %s35 = int_to_ptr.hbm [resolvable:$true] %s34
      %37 = dma.vmem_to_hbm [thread:$0]  %s33, 256, %s35, [#allocation4]
    $region13: #{tpu_custom_call.1} parent=1 // pred_fallthru
      _
    // Predicated region
    $region14: #{tpu_custom_call.1} parent=1 // pred_check
      _
    $region15: #{tpu_custom_call.1} parent=1 // pred_check_branch
      %39 = sbr.rel (0) target = $region17
    $region16: #{tpu_custom_call.1} parent=1 // pred_region
      %41 = dma.done [#allocation4], 256
    $region17: #{tpu_custom_call.1} parent=1 // pred_fallthru
      _
    %42 = vsyncpa [#allocation3], 1
    %43 = vsyncpa [#allocation4], 1

</llo_original>
